<compile_context>
chip_gen: v7x
topology: tpu7x:2x2x1
jax: 0.10.0
libtpu: 0.0.40
codegen_flags: <defaults>
</compile_context>

<pallas_src>
import functools

import jax
import jax.numpy as jnp
from jax.experimental import pallas as pl
from jax.experimental.pallas import tpu as pltpu

hidden_dim = 15
input_dim = 22
layer_dim = 1
output_dim = 1

_SUBLANE = 8
_LANE = 128


def _round_up(n, m):
    return ((n + m - 1) // m) * m


def rnn_fc_kernel(x_ref, wih_ref, whh_ref, b_ref, wfc_ref, bfc_ref, o_ref):
    """Single invocation: full RNN(relu) over T steps + final fc.

    x_ref   : (T, Bp, Dp)   time-major, zero-padded input
    wih_ref : (Dp, Hp)      W_ih^T (zero-padded)
    whh_ref : (Hp, Hp)      W_hh^T (zero-padded)
    b_ref   : (1, Hp)       b_ih + b_hh (zero-padded)
    wfc_ref : (Hp, Op)      W_fc^T (zero-padded)
    bfc_ref : (1, Op)       b_fc (zero-padded)
    o_ref   : (Bp, Op)      lane-dense output (sliced to (B, O) by wrapper)
    """
    T, Bp, Dp = x_ref.shape
    Hp = whh_ref.shape[0]

    # Stage 1 (off the serial critical path): project every timestep at once
    # as a single (T*Bp, Dp) x (Dp, Hp) matmul + bias.
    x_all = x_ref[...].reshape(T * Bp, Dp)                       # (T*Bp, Dp)
    pre_in = (jnp.dot(x_all, wih_ref[...],
                      preferred_element_type=jnp.float32)
              + b_ref[...])                                      # (T*Bp, Hp)

    # Stage 2: serial recurrence — only h @ W_hh^T sits on the dependent
    # chain. whh_ref is re-read from VMEM in each unrolled step instead of
    # being held in vregs across the whole chain (avoids spills).
    h = jnp.zeros((Bp, Hp), jnp.float32)                         # h0 = 0
    for t in range(T):  # T static & tiny -> fully unrolled
        pre = (pre_in[t * Bp:(t + 1) * Bp, :]
               + jnp.dot(h, whh_ref[...],
                         preferred_element_type=jnp.float32))
        h = jnp.maximum(pre, 0.0)                                # relu

    # Final fc on the last hidden state.
    o_ref[...] = (jnp.dot(h, wfc_ref[...],
                          preferred_element_type=jnp.float32)
                  + bfc_ref[...])


def prepare_padded_params(params):
    """Pad/transpose the constant operands ONCE (hardware-aligned tiles).

    Padding lanes of the weights / biases are zero, so the padded hidden
    columns stay exactly zero through the relu recurrence and numerics match
    the unpadded reference.
    """
    H, D_in = params["w_ih"].shape
    O = params["w_fc"].shape[0]
    Dp = _round_up(D_in, _LANE)
    Hp = _round_up(H, _LANE)
    Op = _round_up(O, _LANE)
    return {
        "w_ih_t": jnp.pad(params["w_ih"].T, ((0, Dp - D_in), (0, Hp - H))),
        "w_hh_t": jnp.pad(params["w_hh"].T, ((0, Hp - H), (0, Hp - H))),
        "b": jnp.pad((params["b_ih"] + params["b_hh"]).reshape(1, H),
                     ((0, 0), (0, Hp - H))),
        "w_fc_t": jnp.pad(params["w_fc"].T, ((0, Hp - H), (0, Op - O))),
        "b_fc": jnp.pad(params["b_fc"].reshape(1, O), ((0, 0), (0, Op - O))),
    }


@functools.partial(jax.jit, static_argnames=("out_dim",))
def rnn_model_forward(x, padded, out_dim):
    """x: (B, T, D_in) float32, batch_first like the PyTorch module.

    `padded` is the output of prepare_padded_params (pre-padded constants).
    """
    B, T, D_in = x.shape
    Dp = padded["w_ih_t"].shape[0]
    Op = padded["w_fc_t"].shape[1]
    Bp = _round_up(max(B, _SUBLANE), _SUBLANE)

    # Time-major + zero-pad the activations (fused into this jit program).
    x_tm = jnp.transpose(x, (1, 0, 2))                           # (T, B, D)
    x_tm = jnp.pad(x_tm, ((0, 0), (0, Bp - B), (0, Dp - D_in)))

    # Single gridless kernel invocation; all operands (<200 KiB) live in VMEM.
    out_p = pl.pallas_call(
        rnn_fc_kernel,
        out_shape=jax.ShapeDtypeStruct((Bp, Op), jnp.float32),
        in_specs=[pl.BlockSpec(memory_space=pltpu.MemorySpace.VMEM)] * 6,
        out_specs=pl.BlockSpec(memory_space=pltpu.MemorySpace.VMEM),
    )(x_tm, padded["w_ih_t"], padded["w_hh_t"], padded["b"],
      padded["w_fc_t"], padded["b_fc"])

    return out_p[:B, :out_dim]


def reference_forward(x, params):
    """Plain-JAX reference matching torch nn.RNN(relu) + Linear."""
    B = x.shape[0]
    H = params["w_hh"].shape[0]
    h = jnp.zeros((B, H), jnp.float32)

    def step(h, x_t):
        h = jax.nn.relu(x_t @ params["w_ih"].T + params["b_ih"]
                        + h @ params["w_hh"].T + params["b_hh"])
        return h, None

    h, _ = jax.lax.scan(step, h, jnp.transpose(x, (1, 0, 2)))
    return h @ params["w_fc"].T + params["b_fc"]


def init_params(key):
    """Deterministic init; shapes match nn.RNN / nn.Linear (uniform +-1/sqrt(H))."""
    ks = jax.random.split(key, 6)
    s_rnn = 1.0 / jnp.sqrt(float(hidden_dim))
    s_fc = 1.0 / jnp.sqrt(float(hidden_dim))
    u = lambda k, shape, s: jax.random.uniform(
        k, shape, jnp.float32, minval=-s, maxval=s)
    return {
        "w_ih": u(ks[0], (hidden_dim, input_dim), s_rnn),
        "w_hh": u(ks[1], (hidden_dim, hidden_dim), s_rnn),
        "b_ih": u(ks[2], (hidden_dim,), s_rnn),
        "b_hh": u(ks[3], (hidden_dim,), s_rnn),
        "w_fc": u(ks[4], (output_dim, hidden_dim), s_fc),
        "b_fc": u(ks[5], (output_dim,), s_fc),
    }


if __name__ == "__main__":
    key = jax.random.PRNGKey(0)
    k_x, k_p = jax.random.split(key)

    batch, seq = 4, 8
    x = jax.random.normal(k_x, (batch, seq, input_dim), jnp.float32)
    params = init_params(k_p)

    # Constants are padded/transposed once here, not on every forward call.
    padded = prepare_padded_params(params)

    out = rnn_model_forward(x, padded, out_dim=output_dim)
    out = jax.block_until_ready(out)

    ref = reference_forward(x, params)
    assert out.shape == (batch, output_dim)
    assert jnp.allclose(out, ref, atol=2e-5, rtol=2e-5), (out, ref)

    print("KERNEL_OK")
</pallas_src>

<mosaic_0001>
module attributes {stable_mosaic.version = 11 : i64} {
  func.func @rnn_fc_kernel(%arg0: memref<8x8x128xf32, #tpu.memory_space<vmem>>, %arg1: memref<128x128xf32, #tpu.memory_space<vmem>>, %arg2: memref<128x128xf32, #tpu.memory_space<vmem>>, %arg3: memref<1x128xf32, #tpu.memory_space<vmem>>, %arg4: memref<128x128xf32, #tpu.memory_space<vmem>>, %arg5: memref<1x128xf32, #tpu.memory_space<vmem>>, %arg6: memref<8x128xf32, #tpu.memory_space<vmem>>) attributes {dimension_semantics = [], scalar_prefetch = 0 : i64, scratch_operands = 0 : i64, tpu.core_type = #tpu.core_type<tc>} {
    %c0 = arith.constant 0 : index
    %c0_0 = arith.constant 0 : index
    %c0_1 = arith.constant 0 : index
    %0 = vector.load %arg0[%c0, %c0_0, %c0_1] : memref<8x8x128xf32, #tpu.memory_space<vmem>>, vector<8x8x128xf32>
    %1 = vector.shape_cast %0 : vector<8x8x128xf32> to vector<64x128xf32>
    %c0_2 = arith.constant 0 : index
    %c0_3 = arith.constant 0 : index
    %2 = vector.load %arg1[%c0_2, %c0_3] : memref<128x128xf32, #tpu.memory_space<vmem>>, vector<128x128xf32>
    %cst = arith.constant dense<0.000000e+00> : vector<64x128xf32>
    %3 = tpu.matmul %1, %2, %cst {dimension_numbers = #tpu.dot_dimension_numbers<[1], [0], [0], [1], [0, 0, 1, 1], [], []>} : vector<64x128xf32>, vector<128x128xf32>, vector<64x128xf32> -> vector<64x128xf32>
    %c0_4 = arith.constant 0 : index
    %c0_5 = arith.constant 0 : index
    %4 = vector.load %arg3[%c0_4, %c0_5] : memref<1x128xf32, #tpu.memory_space<vmem>>, vector<1x128xf32>
    %5 = vector.broadcast %4 : vector<1x128xf32> to vector<64x128xf32>
    %6 = arith.addf %3, %5 : vector<64x128xf32>
    %cst_6 = arith.constant 0.000000e+00 : f32
    %7 = vector.broadcast %cst_6 : f32 to vector<8x128xf32>
    %8 = vector.extract_strided_slice %6 {offsets = [0, 0], sizes = [8, 128], strides = [1, 1]} : vector<64x128xf32> to vector<8x128xf32>
    %c0_7 = arith.constant 0 : index
    %c0_8 = arith.constant 0 : index
    %9 = vector.load %arg2[%c0_7, %c0_8] : memref<128x128xf32, #tpu.memory_space<vmem>>, vector<128x128xf32>
    %cst_9 = arith.constant dense<0.000000e+00> : vector<8x128xf32>
    %10 = tpu.matmul %7, %9, %cst_9 {dimension_numbers = #tpu.dot_dimension_numbers<[1], [0], [0], [1], [0, 0, 1, 1], [], []>} : vector<8x128xf32>, vector<128x128xf32>, vector<8x128xf32> -> vector<8x128xf32>
    %11 = arith.addf %8, %10 : vector<8x128xf32>
    %cst_10 = arith.constant 0.000000e+00 : f32
    %12 = vector.broadcast %cst_10 : f32 to vector<8x128xf32>
    %13 = arith.maximumf %11, %12 : vector<8x128xf32>
    %14 = vector.extract_strided_slice %6 {offsets = [8, 0], sizes = [8, 128], strides = [1, 1]} : vector<64x128xf32> to vector<8x128xf32>
    %c0_11 = arith.constant 0 : index
    %c0_12 = arith.constant 0 : index
    %15 = vector.load %arg2[%c0_11, %c0_12] : memref<128x128xf32, #tpu.memory_space<vmem>>, vector<128x128xf32>
    %cst_13 = arith.constant dense<0.000000e+00> : vector<8x128xf32>
    %16 = tpu.matmul %13, %15, %cst_13 {dimension_numbers = #tpu.dot_dimension_numbers<[1], [0], [0], [1], [0, 0, 1, 1], [], []>} : vector<8x128xf32>, vector<128x128xf32>, vector<8x128xf32> -> vector<8x128xf32>
    %17 = arith.addf %14, %16 : vector<8x128xf32>
    %cst_14 = arith.constant 0.000000e+00 : f32
    %18 = vector.broadcast %cst_14 : f32 to vector<8x128xf32>
    %19 = arith.maximumf %17, %18 : vector<8x128xf32>
    %20 = vector.extract_strided_slice %6 {offsets = [16, 0], sizes = [8, 128], strides = [1, 1]} : vector<64x128xf32> to vector<8x128xf32>
    %c0_15 = arith.constant 0 : index
    %c0_16 = arith.constant 0 : index
    %21 = vector.load %arg2[%c0_15, %c0_16] : memref<128x128xf32, #tpu.memory_space<vmem>>, vector<128x128xf32>
    %cst_17 = arith.constant dense<0.000000e+00> : vector<8x128xf32>
    %22 = tpu.matmul %19, %21, %cst_17 {dimension_numbers = #tpu.dot_dimension_numbers<[1], [0], [0], [1], [0, 0, 1, 1], [], []>} : vector<8x128xf32>, vector<128x128xf32>, vector<8x128xf32> -> vector<8x128xf32>
    %23 = arith.addf %20, %22 : vector<8x128xf32>
    %cst_18 = arith.constant 0.000000e+00 : f32
    %24 = vector.broadcast %cst_18 : f32 to vector<8x128xf32>
    %25 = arith.maximumf %23, %24 : vector<8x128xf32>
    %26 = vector.extract_strided_slice %6 {offsets = [24, 0], sizes = [8, 128], strides = [1, 1]} : vector<64x128xf32> to vector<8x128xf32>
    %c0_19 = arith.constant 0 : index
    %c0_20 = arith.constant 0 : index
    %27 = vector.load %arg2[%c0_19, %c0_20] : memref<128x128xf32, #tpu.memory_space<vmem>>, vector<128x128xf32>
    %cst_21 = arith.constant dense<0.000000e+00> : vector<8x128xf32>
    %28 = tpu.matmul %25, %27, %cst_21 {dimension_numbers = #tpu.dot_dimension_numbers<[1], [0], [0], [1], [0, 0, 1, 1], [], []>} : vector<8x128xf32>, vector<128x128xf32>, vector<8x128xf32> -> vector<8x128xf32>
    %29 = arith.addf %26, %28 : vector<8x128xf32>
    %cst_22 = arith.constant 0.000000e+00 : f32
    %30 = vector.broadcast %cst_22 : f32 to vector<8x128xf32>
    %31 = arith.maximumf %29, %30 : vector<8x128xf32>
    %32 = vector.extract_strided_slice %6 {offsets = [32, 0], sizes = [8, 128], strides = [1, 1]} : vector<64x128xf32> to vector<8x128xf32>
    %c0_23 = arith.constant 0 : index
    %c0_24 = arith.constant 0 : index
    %33 = vector.load %arg2[%c0_23, %c0_24] : memref<128x128xf32, #tpu.memory_space<vmem>>, vector<128x128xf32>
    %cst_25 = arith.constant dense<0.000000e+00> : vector<8x128xf32>
    %34 = tpu.matmul %31, %33, %cst_25 {dimension_numbers = #tpu.dot_dimension_numbers<[1], [0], [0], [1], [0, 0, 1, 1], [], []>} : vector<8x128xf32>, vector<128x128xf32>, vector<8x128xf32> -> vector<8x128xf32>
    %35 = arith.addf %32, %34 : vector<8x128xf32>
    %cst_26 = arith.constant 0.000000e+00 : f32
    %36 = vector.broadcast %cst_26 : f32 to vector<8x128xf32>
    %37 = arith.maximumf %35, %36 : vector<8x128xf32>
    %38 = vector.extract_strided_slice %6 {offsets = [40, 0], sizes = [8, 128], strides = [1, 1]} : vector<64x128xf32> to vector<8x128xf32>
    %c0_27 = arith.constant 0 : index
    %c0_28 = arith.constant 0 : index
    %39 = vector.load %arg2[%c0_27, %c0_28] : memref<128x128xf32, #tpu.memory_space<vmem>>, vector<128x128xf32>
    %cst_29 = arith.constant dense<0.000000e+00> : vector<8x128xf32>
    %40 = tpu.matmul %37, %39, %cst_29 {dimension_numbers = #tpu.dot_dimension_numbers<[1], [0], [0], [1], [0, 0, 1, 1], [], []>} : vector<8x128xf32>, vector<128x128xf32>, vector<8x128xf32> -> vector<8x128xf32>
    %41 = arith.addf %38, %40 : vector<8x128xf32>
    %cst_30 = arith.constant 0.000000e+00 : f32
    %42 = vector.broadcast %cst_30 : f32 to vector<8x128xf32>
    %43 = arith.maximumf %41, %42 : vector<8x128xf32>
    %44 = vector.extract_strided_slice %6 {offsets = [48, 0], sizes = [8, 128], strides = [1, 1]} : vector<64x128xf32> to vector<8x128xf32>
    %c0_31 = arith.constant 0 : index
    %c0_32 = arith.constant 0 : index
    %45 = vector.load %arg2[%c0_31, %c0_32] : memref<128x128xf32, #tpu.memory_space<vmem>>, vector<128x128xf32>
    %cst_33 = arith.constant dense<0.000000e+00> : vector<8x128xf32>
    %46 = tpu.matmul %43, %45, %cst_33 {dimension_numbers = #tpu.dot_dimension_numbers<[1], [0], [0], [1], [0, 0, 1, 1], [], []>} : vector<8x128xf32>, vector<128x128xf32>, vector<8x128xf32> -> vector<8x128xf32>
    %47 = arith.addf %44, %46 : vector<8x128xf32>
    %cst_34 = arith.constant 0.000000e+00 : f32
    %48 = vector.broadcast %cst_34 : f32 to vector<8x128xf32>
    %49 = arith.maximumf %47, %48 : vector<8x128xf32>
    %50 = vector.extract_strided_slice %6 {offsets = [56, 0], sizes = [8, 128], strides = [1, 1]} : vector<64x128xf32> to vector<8x128xf32>
    %c0_35 = arith.constant 0 : index
    %c0_36 = arith.constant 0 : index
    %51 = vector.load %arg2[%c0_35, %c0_36] : memref<128x128xf32, #tpu.memory_space<vmem>>, vector<128x128xf32>
    %cst_37 = arith.constant dense<0.000000e+00> : vector<8x128xf32>
    %52 = tpu.matmul %49, %51, %cst_37 {dimension_numbers = #tpu.dot_dimension_numbers<[1], [0], [0], [1], [0, 0, 1, 1], [], []>} : vector<8x128xf32>, vector<128x128xf32>, vector<8x128xf32> -> vector<8x128xf32>
    %53 = arith.addf %50, %52 : vector<8x128xf32>
    %cst_38 = arith.constant 0.000000e+00 : f32
    %54 = vector.broadcast %cst_38 : f32 to vector<8x128xf32>
    %55 = arith.maximumf %53, %54 : vector<8x128xf32>
    %c0_39 = arith.constant 0 : index
    %c0_40 = arith.constant 0 : index
    %56 = vector.load %arg4[%c0_39, %c0_40] : memref<128x128xf32, #tpu.memory_space<vmem>>, vector<128x128xf32>
    %cst_41 = arith.constant dense<0.000000e+00> : vector<8x128xf32>
    %57 = tpu.matmul %55, %56, %cst_41 {dimension_numbers = #tpu.dot_dimension_numbers<[1], [0], [0], [1], [0, 0, 1, 1], [], []>} : vector<8x128xf32>, vector<128x128xf32>, vector<8x128xf32> -> vector<8x128xf32>
    %c0_42 = arith.constant 0 : index
    %c0_43 = arith.constant 0 : index
    %58 = vector.load %arg5[%c0_42, %c0_43] : memref<1x128xf32, #tpu.memory_space<vmem>>, vector<1x128xf32>
    %59 = vector.broadcast %58 : vector<1x128xf32> to vector<8x128xf32>
    %60 = arith.addf %57, %59 : vector<8x128xf32>
    %c0_44 = arith.constant 0 : index
    %c0_45 = arith.constant 0 : index
    %61 = vector.load %arg6[%c0_44, %c0_45] : memref<8x128xf32, #tpu.memory_space<vmem>>, vector<8x128xf32>
    tpu.vector_store %arg6[%c0_44, %c0_45], %60 {strides = array<i32>} : memref<8x128xf32, #tpu.memory_space<vmem>>, vector<8x128xf32>,
    return
  }
}

</mosaic_0001>

<llo_original>
// kernel: rnn_model_forward.1
$region0: #{rnn_model_forward.1}
  #allocation0 [shape = 'u32[]', space=smem, size = 0x4, offset = 0x4, fixed_abs, tag = 'smem constant byte address 0x4 - core index']
  #allocation1 [shape = 'u32[144,128]{1,0:T(1,128)}', space=vmem, size = 0x12000, scoped, tag = 'internal scratch']
  %s0 = inlined_call_operand.vmem [shape: f32[8,8,128], index: 0, kind: input, shape index: {}]
  %s1 = inlined_call_operand.vmem [shape: f32[128,128], index: 1, kind: input, shape index: {}]
  %s2 = inlined_call_operand.hbm [shape: f32[128,128], index: 2, kind: input, shape index: {}]
  %s3 = inlined_call_operand.vmem [shape: f32[1,128], index: 3, kind: input, shape index: {}]
  %s4 = inlined_call_operand.hbm [shape: f32[128,128], index: 4, kind: input, shape index: {}]
  %s5 = inlined_call_operand.vmem [shape: f32[1,128], index: 5, kind: input, shape index: {}]
  %s6 = inlined_call_operand.vmem [shape: f32[8,128], index: 6, kind: output, shape index: {}]
  %s7 = sld [smem:[#allocation0]]
  $region42: #{rnn_model_forward.1} parent=0
    _
  %s9 = ssub.s32 1, %s7
  %s10 = scalar_select 0, %s9, %s7
  $region1: #{rnn_model_forward.1} parent=0
    #allocation2 [shape = 'u8[65536]{0}', space=vmem, size = 0x10000, scoped, tag = 'input window, operand 2, single buffered']
    #allocation3 [shape = 's32[1]{0}', space=sflag, size = 0x4, scoped, tag = 'scoped memory for rnn_model_forward.1']
    #allocation4 [shape = 'u8[65536]{0}', space=vmem, size = 0x10000, scoped, tag = 'input window, operand 4, single buffered']
    #allocation5 [shape = 's32[1]{0}', space=sflag, size = 0x4, scoped, tag = 'scoped memory for rnn_model_forward.1']
    %11 = vsyncpa [#allocation3], 0
    %12 = vsyncpa [#allocation5], 0
    // Predicated region
    $region2: #{rnn_model_forward.1} parent=1 // pred_check
      _
    $region3: #{rnn_model_forward.1} parent=1 // pred_check_branch
      %14 = sbr.rel (0) target = $region5
    $region4: #{rnn_model_forward.1} parent=1 // pred_region
      _
    $region5: #{rnn_model_forward.1} parent=1 // pred_fallthru
      _
    // Predicated region
    $region6: #{rnn_model_forward.1} parent=1 // pred_check
      _
    $region7: #{rnn_model_forward.1} parent=1 // pred_check_branch
      %16 = sbr.rel (0) target = $region9
    $region8: #{rnn_model_forward.1} parent=1 // pred_region
      _
    $region9: #{rnn_model_forward.1} parent=1 // pred_fallthru
      _
    // Predicated region
    $region10: #{rnn_model_forward.1} parent=1 // pred_check
      _
    $region11: #{rnn_model_forward.1} parent=1 // pred_check_branch
      %18 = sbr.rel (0) target = $region13
    $region12: #{rnn_model_forward.1} parent=1 // pred_region
      %s20 = ssub.s32 2048, 2048
      %21 = vsyncadd [#allocation3], %s20
      %s22 = sshll.u32 [#allocation2], 4
      %s23 = int_to_ptr.vmem [resolvable:$true] %s22
      %28 = dma.hbm_to_vmem [thread:$0]  %s2, 2048, %s23, [#allocation3], 128, 128, 8
    $region13: #{rnn_model_forward.1} parent=1 // pred_fallthru
      _
    // Predicated region
    $region14: #{rnn_model_forward.1} parent=1 // pred_check
      _
    $region15: #{rnn_model_forward.1} parent=1 // pred_check_branch
      %30 = sbr.rel (0) target = $region17
    $region16: #{rnn_model_forward.1} parent=1 // pred_region
      _
    $region17: #{rnn_model_forward.1} parent=1 // pred_fallthru
      _
    // Predicated region
    $region18: #{rnn_model_forward.1} parent=1 // pred_check
      _
    $region19: #{rnn_model_forward.1} parent=1 // pred_check_branch
      %32 = sbr.rel (0) target = $region21
    $region20: #{rnn_model_forward.1} parent=1 // pred_region
      %s34 = ssub.s32 2048, 2048
      %35 = vsyncadd [#allocation5], %s34
      %s36 = sshll.u32 [#allocation4], 4
      %s37 = int_to_ptr.vmem [resolvable:$true] %s36
      %42 = dma.hbm_to_vmem [thread:$0]  %s4, 2048, %s37, [#allocation5], 128, 128, 8
    $region21: #{rnn_model_forward.1} parent=1 // pred_fallthru
      _
    // Predicated region
    $region22: #{rnn_model_forward.1} parent=1 // pred_check
      _
    $region23: #{rnn_model_forward.1} parent=1 // pred_check_branch
      %44 = sbr.rel (0) target = $region25
    $region24: #{rnn_model_forward.1} parent=1 // pred_region
      _
    $region25: #{rnn_model_forward.1} parent=1 // pred_fallthru
      _
    // Predicated region
    $region26: #{rnn_model_forward.1} parent=1 // pred_check
      _
    $region27: #{rnn_model_forward.1} parent=1 // pred_check_branch
      %46 = sbr.rel (0) target = $region29
    $region28: #{rnn_model_forward.1} parent=1 // pred_region
      %47 = dma.done [#allocation3], 2048
    $region29: #{rnn_model_forward.1} parent=1 // pred_fallthru
      _
    // Predicated region
    $region30: #{rnn_model_forward.1} parent=1 // pred_check
      _
    $region31: #{rnn_model_forward.1} parent=1 // pred_check_branch
      %49 = sbr.rel (0) target = $region33
    $region32: #{rnn_model_forward.1} parent=1 // pred_region
      %50 = dma.done [#allocation5], 2048
    $region33: #{rnn_model_forward.1} parent=1 // pred_fallthru
      _
    %v51 = vld [vmem:[%s0] sm:$0xff]
    %v52 = vld [vmem:[%s0 + $0x8] sm:$0xff]
    %v53 = vld [vmem:[%s0 + $0x10] sm:$0xff]
    %v54 = vld [vmem:[%s0 + $0x18] sm:$0xff]
    %v55 = vld [vmem:[%s0 + $0x20] sm:$0xff]
    %v56 = vld [vmem:[%s0 + $0x28] sm:$0xff]
    %v57 = vld [vmem:[%s0 + $0x30] sm:$0xff]
    %v58 = vld [vmem:[%s0 + $0x38] sm:$0xff]
    %v59 = vld [vmem:[%s1] sm:$0xff]
    %v60 = vld [vmem:[%s1 + $0x8] sm:$0xff]
    %v61 = vld [vmem:[%s1 + $0x10] sm:$0xff]
    %v62 = vld [vmem:[%s1 + $0x18] sm:$0xff]
    %v63 = vld [vmem:[%s1 + $0x20] sm:$0xff]
    %v64 = vld [vmem:[%s1 + $0x28] sm:$0xff]
    %v65 = vld [vmem:[%s1 + $0x30] sm:$0xff]
    %v66 = vld [vmem:[%s1 + $0x38] sm:$0xff]
    %v67 = vld [vmem:[%s1 + $0x40] sm:$0xff]
    %v68 = vld [vmem:[%s1 + $0x48] sm:$0xff]
    %v69 = vld [vmem:[%s1 + $0x50] sm:$0xff]
    %v70 = vld [vmem:[%s1 + $0x58] sm:$0xff]
    %v71 = vld [vmem:[%s1 + $0x60] sm:$0xff]
    %v72 = vld [vmem:[%s1 + $0x68] sm:$0xff]
    %v73 = vld [vmem:[%s1 + $0x70] sm:$0xff]
    %v74 = vld [vmem:[%s1 + $0x78] sm:$0xff]
    %v75 = vld [vmem:[%s3] sm:$0x1]
    %v77 = vlaneseq
    %v78 = vshrl.u32 %v77, 7
    %v79 = vsub.s32 0, %v78
    %v80 = vrot.slane %v75, %v79
    %82 = vmatprep.subr.mxu0 0.0
    %83 = vmatpush1.msra.mxu0 %v59
    %84 = vmatprep.subr.mxu0 0.0
    %85 = vmatpush1.msra.mxu0 %v60
    %86 = vmatprep.subr.mxu0 0.0
    %87 = vmatpush1.msra.mxu0 %v61
    %88 = vmatprep.subr.mxu0 0.0
    %89 = vmatpush1.msra.mxu0 %v62
    %90 = vmatprep.subr.mxu0 0.0
    %91 = vmatpush1.msra.mxu0 %v63
    %92 = vmatprep.subr.mxu0 0.0
    %93 = vmatpush1.msra.mxu0 %v64
    %94 = vmatprep.subr.mxu0 0.0
    %95 = vmatpush1.msra.mxu0 %v65
    %96 = vmatprep.subr.mxu0 0.0
    %97 = vmatpush1.msra.mxu0 %v66
    %98 = vmatprep.subr.mxu0 0.0
    %99 = vmatpush1.msra.mxu0 %v67
    %100 = vmatprep.subr.mxu0 0.0
    %101 = vmatpush1.msra.mxu0 %v68
    %102 = vmatprep.subr.mxu0 0.0
    %103 = vmatpush1.msra.mxu0 %v69
    %104 = vmatprep.subr.mxu0 0.0
    %105 = vmatpush1.msra.mxu0 %v70
    %106 = vmatprep.subr.mxu0 0.0
    %107 = vmatpush1.msra.mxu0 %v71
    %108 = vmatprep.subr.mxu0 0.0
    %109 = vmatpush1.msra.mxu0 %v72
    %110 = vmatprep.subr.mxu0 0.0
    %111 = vmatpush1.msra.mxu0 %v73
    %112 = vmatprep.subr.mxu0 0.0
    %113 = vmatpush1.msra.mxu0 %v74
    %114 = vmatprep.subr.mxu0 0.0
    %115 = vmatpush1.msra.mxu0 0.0
    %116 = vmatprep.subr.mxu0 0.0
    %117 = vmatpush1.msra.mxu0 0.0
    %118 = vmatprep.subr.mxu0 0.0
    %119 = vmatpush1.msra.mxu0 0.0
    %120 = vmatprep.subr.mxu0 0.0
    %121 = vmatpush1.msra.mxu0 0.0
    %122 = vmatprep.subr.mxu0 0.0
    %123 = vmatpush1.msra.mxu0 0.0
    %124 = vmatprep.subr.mxu0 0.0
    %125 = vmatpush1.msra.mxu0 0.0
    %126 = vmatprep.subr.mxu0 0.0
    %127 = vmatpush1.msra.mxu0 0.0
    %128 = vmatprep.subr.mxu0 0.0
    %129 = vmatpush1.msra.mxu0 0.0
    %130 = vmatprep.subr.mxu0 0.0
    %131 = vmatpush1.msra.mxu0 0.0
    %132 = vmatprep.subr.mxu0 0.0
    %133 = vmatpush1.msra.mxu0 0.0
    %134 = vmatprep.subr.mxu0 0.0
    %135 = vmatpush1.msra.mxu0 0.0
    %136 = vmatprep.subr.mxu0 0.0
    %137 = vmatpush1.msra.mxu0 0.0
    %138 = vmatprep.subr.mxu0 0.0
    %139 = vmatpush1.msra.mxu0 0.0
    %140 = vmatprep.subr.mxu0 0.0
    %141 = vmatpush1.msra.mxu0 0.0
    %142 = vmatprep.subr.mxu0 0.0
    %143 = vmatpush1.msra.mxu0 0.0
    %144 = vmatprep.subr.mxu0 0.0
    %145 = vmatpush1.msra.mxu0 0.0
    %146 = vmatprep.mubr.f32.mxu0 0.0
    %147 = vmatmul.mubr.f32.gmra.mrb[0].mxu0 %v51
    %v148 = vpop.f32.mrb[0].mxu0
    %v149 = vadd.f32 %v80, %v148
    %v150 = vpop.f32.mrb[0].mxu0
    %151 = vmatprep.mubr.f32.mxu0 0.0
    %152 = vmatmul.mubr.f32.gmra.mrb[0].mxu0 %v52
    %v153 = vpop.f32.mrb[0].mxu0
    %v154 = vadd.f32 %v80, %v153
    %v155 = vpop.f32.mrb[0].mxu0
    %156 = vmatprep.mubr.f32.mxu0 0.0
    %157 = vmatmul.mubr.f32.gmra.mrb[0].mxu0 %v53
    %v158 = vpop.f32.mrb[0].mxu0
    %v159 = vadd.f32 %v80, %v158
    %v160 = vpop.f32.mrb[0].mxu0
    %161 = vmatprep.mubr.f32.mxu0 0.0
    %162 = vmatmul.mubr.f32.gmra.mrb[0].mxu0 %v54
    %v163 = vpop.f32.mrb[0].mxu0
    %v164 = vadd.f32 %v80, %v163
    %v165 = vpop.f32.mrb[0].mxu0
    %166 = vmatprep.mubr.f32.mxu0 0.0
    %167 = vmatmul.mubr.f32.gmra.mrb[0].mxu0 %v55
    %v168 = vpop.f32.mrb[0].mxu0
    %v169 = vadd.f32 %v80, %v168
    %v170 = vpop.f32.mrb[0].mxu0
    %171 = vmatprep.mubr.f32.mxu0 0.0
    %172 = vmatmul.mubr.f32.gmra.mrb[0].mxu0 %v56
    %v173 = vpop.f32.mrb[0].mxu0
    %v174 = vadd.f32 %v80, %v173
    %v175 = vpop.f32.mrb[0].mxu0
    %176 = vmatprep.mubr.f32.mxu0 0.0
    %177 = vmatmul.mubr.f32.gmra.mrb[0].mxu0 %v57
    %v178 = vpop.f32.mrb[0].mxu0
    %v179 = vadd.f32 %v80, %v178
    %v180 = vpop.f32.mrb[0].mxu0
    %181 = vmatprep.mubr.f32.mxu0 0.0
    %182 = vmatmul.mubr.f32.gmra.mrb[0].mxu0 %v58
    %v183 = vpop.f32.mrb[0].mxu0
    %v184 = vadd.f32 %v80, %v183
    %v185 = vpop.f32.mrb[0].mxu0
    %186 = vdwg.mxu0
    %v187 = vld [vmem:[#allocation2] sm:$0xff]
    %v188 = vld [vmem:[#allocation2 + $0x8] sm:$0xff]
    %v189 = vld [vmem:[#allocation2 + $0x10] sm:$0xff]
    %v190 = vld [vmem:[#allocation2 + $0x18] sm:$0xff]
    %v191 = vld [vmem:[#allocation2 + $0x20] sm:$0xff]
    %v192 = vld [vmem:[#allocation2 + $0x28] sm:$0xff]
    %v193 = vld [vmem:[#allocation2 + $0x30] sm:$0xff]
    %v194 = vld [vmem:[#allocation2 + $0x38] sm:$0xff]
    %v195 = vld [vmem:[#allocation2 + $0x40] sm:$0xff]
    %v196 = vld [vmem:[#allocation2 + $0x48] sm:$0xff]
    %v197 = vld [vmem:[#allocation2 + $0x50] sm:$0xff]
    %v198 = vld [vmem:[#allocation2 + $0x58] sm:$0xff]
    %v199 = vld [vmem:[#allocation2 + $0x60] sm:$0xff]
    %v200 = vld [vmem:[#allocation2 + $0x68] sm:$0xff]
    %v201 = vld [vmem:[#allocation2 + $0x70] sm:$0xff]
    %v202 = vld [vmem:[#allocation2 + $0x78] sm:$0xff]
    %203 = vmatprep.subr.mxu0 0.0
    %204 = vmatpush1.msra.mxu0 %v187
    %205 = vmatprep.subr.mxu0 0.0
    %206 = vmatpush1.msra.mxu0 %v188
    %207 = vmatprep.subr.mxu0 0.0
    %208 = vmatpush1.msra.mxu0 %v189
    %209 = vmatprep.subr.mxu0 0.0
    %210 = vmatpush1.msra.mxu0 %v190
    %211 = vmatprep.subr.mxu0 0.0
    %212 = vmatpush1.msra.mxu0 %v191
    %213 = vmatprep.subr.mxu0 0.0
    %214 = vmatpush1.msra.mxu0 %v192
    %215 = vmatprep.subr.mxu0 0.0
    %216 = vmatpush1.msra.mxu0 %v193
    %217 = vmatprep.subr.mxu0 0.0
    %218 = vmatpush1.msra.mxu0 %v194
    %219 = vmatprep.subr.mxu0 0.0
    %220 = vmatpush1.msra.mxu0 %v195
    %221 = vmatprep.subr.mxu0 0.0
    %222 = vmatpush1.msra.mxu0 %v196
    %223 = vmatprep.subr.mxu0 0.0
    %224 = vmatpush1.msra.mxu0 %v197
    %225 = vmatprep.subr.mxu0 0.0
    %226 = vmatpush1.msra.mxu0 %v198
    %227 = vmatprep.subr.mxu0 0.0
    %228 = vmatpush1.msra.mxu0 %v199
    %229 = vmatprep.subr.mxu0 0.0
    %230 = vmatpush1.msra.mxu0 %v200
    %231 = vmatprep.subr.mxu0 0.0
    %232 = vmatpush1.msra.mxu0 %v201
    %233 = vmatprep.subr.mxu0 0.0
    %234 = vmatpush1.msra.mxu0 %v202
    %235 = vmatprep.subr.mxu0 0.0
    %236 = vmatpush1.msra.mxu0 0.0
    %237 = vmatprep.subr.mxu0 0.0
    %238 = vmatpush1.msra.mxu0 0.0
    %239 = vmatprep.subr.mxu0 0.0
    %240 = vmatpush1.msra.mxu0 0.0
    %241 = vmatprep.subr.mxu0 0.0
    %242 = vmatpush1.msra.mxu0 0.0
    %243 = vmatprep.subr.mxu0 0.0
    %244 = vmatpush1.msra.mxu0 0.0
    %245 = vmatprep.subr.mxu0 0.0
    %246 = vmatpush1.msra.mxu0 0.0
    %247 = vmatprep.subr.mxu0 0.0
    %248 = vmatpush1.msra.mxu0 0.0
    %249 = vmatprep.subr.mxu0 0.0
    %250 = vmatpush1.msra.mxu0 0.0
    %251 = vmatprep.subr.mxu0 0.0
    %252 = vmatpush1.msra.mxu0 0.0
    %253 = vmatprep.subr.mxu0 0.0
    %254 = vmatpush1.msra.mxu0 0.0
    %255 = vmatprep.subr.mxu0 0.0
    %256 = vmatpush1.msra.mxu0 0.0
    %257 = vmatprep.subr.mxu0 0.0
    %258 = vmatpush1.msra.mxu0 0.0
    %259 = vmatprep.subr.mxu0 0.0
    %260 = vmatpush1.msra.mxu0 0.0
    %261 = vmatprep.subr.mxu0 0.0
    %262 = vmatpush1.msra.mxu0 0.0
    %263 = vmatprep.subr.mxu0 0.0
    %264 = vmatpush1.msra.mxu0 0.0
    %265 = vmatprep.subr.mxu0 0.0
    %266 = vmatpush1.msra.mxu0 0.0
    %267 = vmatprep.mubr.f32.mxu0 0.0
    %268 = vmatmul.mubr.f32.gmra.mrb[0].mxu0 0.0
    %v269 = vpop.f32.mrb[0].mxu0
    %v270 = vadd.f32 0.0, %v269
    %v271 = vpop.f32.mrb[0].mxu0
    %272 = vdwg.mxu0
    %v273 = vadd.f32 %v149, %v270
    %v274 = vmax.f32 %v273, 0.0
    %275 = vmatprep.subr.mxu0 0.0
    %276 = vmatpush1.msra.mxu0 %v187
    %277 = vmatprep.subr.mxu0 0.0
    %278 = vmatpush1.msra.mxu0 %v188
    %279 = vmatprep.subr.mxu0 0.0
    %280 = vmatpush1.msra.mxu0 %v189
    %281 = vmatprep.subr.mxu0 0.0
    %282 = vmatpush1.msra.mxu0 %v190
    %283 = vmatprep.subr.mxu0 0.0
    %284 = vmatpush1.msra.mxu0 %v191
    %285 = vmatprep.subr.mxu0 0.0
    %286 = vmatpush1.msra.mxu0 %v192
    %287 = vmatprep.subr.mxu0 0.0
    %288 = vmatpush1.msra.mxu0 %v193
    %289 = vmatprep.subr.mxu0 0.0
    %290 = vmatpush1.msra.mxu0 %v194
    %291 = vmatprep.subr.mxu0 0.0
    %292 = vmatpush1.msra.mxu0 %v195
    %293 = vmatprep.subr.mxu0 0.0
    %294 = vmatpush1.msra.mxu0 %v196
    %295 = vmatprep.subr.mxu0 0.0
    %296 = vmatpush1.msra.mxu0 %v197
    %297 = vmatprep.subr.mxu0 0.0
    %298 = vmatpush1.msra.mxu0 %v198
    %299 = vmatprep.subr.mxu0 0.0
    %300 = vmatpush1.msra.mxu0 %v199
    %301 = vmatprep.subr.mxu0 0.0
    %302 = vmatpush1.msra.mxu0 %v200
    %303 = vmatprep.subr.mxu0 0.0
    %304 = vmatpush1.msra.mxu0 %v201
    %305 = vmatprep.subr.mxu0 0.0
    %306 = vmatpush1.msra.mxu0 %v202
    %307 = vmatprep.subr.mxu0 0.0
    %308 = vmatpush1.msra.mxu0 0.0
    %309 = vmatprep.subr.mxu0 0.0
    %310 = vmatpush1.msra.mxu0 0.0
    %311 = vmatprep.subr.mxu0 0.0
    %312 = vmatpush1.msra.mxu0 0.0
    %313 = vmatprep.subr.mxu0 0.0
    %314 = vmatpush1.msra.mxu0 0.0
    %315 = vmatprep.subr.mxu0 0.0
    %316 = vmatpush1.msra.mxu0 0.0
    %317 = vmatprep.subr.mxu0 0.0
    %318 = vmatpush1.msra.mxu0 0.0
    %319 = vmatprep.subr.mxu0 0.0
    %320 = vmatpush1.msra.mxu0 0.0
    %321 = vmatprep.subr.mxu0 0.0
    %322 = vmatpush1.msra.mxu0 0.0
    %323 = vmatprep.subr.mxu0 0.0
    %324 = vmatpush1.msra.mxu0 0.0
    %325 = vmatprep.subr.mxu0 0.0
    %326 = vmatpush1.msra.mxu0 0.0
    %327 = vmatprep.subr.mxu0 0.0
    %328 = vmatpush1.msra.mxu0 0.0
    %329 = vmatprep.subr.mxu0 0.0
    %330 = vmatpush1.msra.mxu0 0.0
    %331 = vmatprep.subr.mxu0 0.0
    %332 = vmatpush1.msra.mxu0 0.0
    %333 = vmatprep.subr.mxu0 0.0
    %334 = vmatpush1.msra.mxu0 0.0
    %335 = vmatprep.subr.mxu0 0.0
    %336 = vmatpush1.msra.mxu0 0.0
    %337 = vmatprep.subr.mxu0 0.0
    %338 = vmatpush1.msra.mxu0 0.0
    %339 = vmatprep.mubr.f32.mxu0 0.0
    %340 = vmatmul.mubr.f32.gmra.mrb[0].mxu0 %v274
    %v341 = vpop.f32.mrb[0].mxu0
    %v342 = vadd.f32 0.0, %v341
    %v343 = vpop.f32.mrb[0].mxu0
    %344 = vdwg.mxu0
    %v345 = vadd.f32 %v154, %v342
    %v346 = vmax.f32 %v345, 0.0
    %347 = vmatprep.subr.mxu0 0.0
    %348 = vmatpush1.msra.mxu0 %v187
    %349 = vmatprep.subr.mxu0 0.0
    %350 = vmatpush1.msra.mxu0 %v188
    %351 = vmatprep.subr.mxu0 0.0
    %352 = vmatpush1.msra.mxu0 %v189
    %353 = vmatprep.subr.mxu0 0.0
    %354 = vmatpush1.msra.mxu0 %v190
    %355 = vmatprep.subr.mxu0 0.0
    %356 = vmatpush1.msra.mxu0 %v191
    %357 = vmatprep.subr.mxu0 0.0
    %358 = vmatpush1.msra.mxu0 %v192
    %359 = vmatprep.subr.mxu0 0.0
    %360 = vmatpush1.msra.mxu0 %v193
    %361 = vmatprep.subr.mxu0 0.0
    %362 = vmatpush1.msra.mxu0 %v194
    %363 = vmatprep.subr.mxu0 0.0
    %364 = vmatpush1.msra.mxu0 %v195
    %365 = vmatprep.subr.mxu0 0.0
    %366 = vmatpush1.msra.mxu0 %v196
    %367 = vmatprep.subr.mxu0 0.0
    %368 = vmatpush1.msra.mxu0 %v197
    %369 = vmatprep.subr.mxu0 0.0
    %370 = vmatpush1.msra.mxu0 %v198
    %371 = vmatprep.subr.mxu0 0.0
    %372 = vmatpush1.msra.mxu0 %v199
    %373 = vmatprep.subr.mxu0 0.0
    %374 = vmatpush1.msra.mxu0 %v200
    %375 = vmatprep.subr.mxu0 0.0
    %376 = vmatpush1.msra.mxu0 %v201
    %377 = vmatprep.subr.mxu0 0.0
    %378 = vmatpush1.msra.mxu0 %v202
    %379 = vmatprep.subr.mxu0 0.0
    %380 = vmatpush1.msra.mxu0 0.0
    %381 = vmatprep.subr.mxu0 0.0
    %382 = vmatpush1.msra.mxu0 0.0
    %383 = vmatprep.subr.mxu0 0.0
    %384 = vmatpush1.msra.mxu0 0.0
    %385 = vmatprep.subr.mxu0 0.0
    %386 = vmatpush1.msra.mxu0 0.0
    %387 = vmatprep.subr.mxu0 0.0
    %388 = vmatpush1.msra.mxu0 0.0
    %389 = vmatprep.subr.mxu0 0.0
    %390 = vmatpush1.msra.mxu0 0.0
    %391 = vmatprep.subr.mxu0 0.0
    %392 = vmatpush1.msra.mxu0 0.0
    %393 = vmatprep.subr.mxu0 0.0
    %394 = vmatpush1.msra.mxu0 0.0
    %395 = vmatprep.subr.mxu0 0.0
    %396 = vmatpush1.msra.mxu0 0.0
    %397 = vmatprep.subr.mxu0 0.0
    %398 = vmatpush1.msra.mxu0 0.0
    %399 = vmatprep.subr.mxu0 0.0
    %400 = vmatpush1.msra.mxu0 0.0
    %401 = vmatprep.subr.mxu0 0.0
    %402 = vmatpush1.msra.mxu0 0.0
    %403 = vmatprep.subr.mxu0 0.0
    %404 = vmatpush1.msra.mxu0 0.0
    %405 = vmatprep.subr.mxu0 0.0
    %406 = vmatpush1.msra.mxu0 0.0
    %407 = vmatprep.subr.mxu0 0.0
    %408 = vmatpush1.msra.mxu0 0.0
    %409 = vmatprep.subr.mxu0 0.0
    %410 = vmatpush1.msra.mxu0 0.0
    %411 = vmatprep.mubr.f32.mxu0 0.0
    %412 = vmatmul.mubr.f32.gmra.mrb[0].mxu0 %v346
    %v413 = vpop.f32.mrb[0].mxu0
    %v414 = vadd.f32 0.0, %v413
    %v415 = vpop.f32.mrb[0].mxu0
    %416 = vdwg.mxu0
    %v417 = vadd.f32 %v159, %v414
    %v418 = vmax.f32 %v417, 0.0
    %419 = vmatprep.subr.mxu0 0.0
    %420 = vmatpush1.msra.mxu0 %v187
    %421 = vmatprep.subr.mxu0 0.0
    %422 = vmatpush1.msra.mxu0 %v188
    %423 = vmatprep.subr.mxu0 0.0
    %424 = vmatpush1.msra.mxu0 %v189
    %425 = vmatprep.subr.mxu0 0.0
    %426 = vmatpush1.msra.mxu0 %v190
    %427 = vmatprep.subr.mxu0 0.0
    %428 = vmatpush1.msra.mxu0 %v191
    %429 = vmatprep.subr.mxu0 0.0
    %430 = vmatpush1.msra.mxu0 %v192
    %431 = vmatprep.subr.mxu0 0.0
    %432 = vmatpush1.msra.mxu0 %v193
    %433 = vmatprep.subr.mxu0 0.0
    %434 = vmatpush1.msra.mxu0 %v194
    %435 = vmatprep.subr.mxu0 0.0
    %436 = vmatpush1.msra.mxu0 %v195
    %437 = vmatprep.subr.mxu0 0.0
    %438 = vmatpush1.msra.mxu0 %v196
    %439 = vmatprep.subr.mxu0 0.0
    %440 = vmatpush1.msra.mxu0 %v197
    %441 = vmatprep.subr.mxu0 0.0
    %442 = vmatpush1.msra.mxu0 %v198
    %443 = vmatprep.subr.mxu0 0.0
    %444 = vmatpush1.msra.mxu0 %v199
    %445 = vmatprep.subr.mxu0 0.0
    %446 = vmatpush1.msra.mxu0 %v200
    %447 = vmatprep.subr.mxu0 0.0
    %448 = vmatpush1.msra.mxu0 %v201
    %449 = vmatprep.subr.mxu0 0.0
    %450 = vmatpush1.msra.mxu0 %v202
    %451 = vmatprep.subr.mxu0 0.0
    %452 = vmatpush1.msra.mxu0 0.0
    %453 = vmatprep.subr.mxu0 0.0
    %454 = vmatpush1.msra.mxu0 0.0
    %455 = vmatprep.subr.mxu0 0.0
    %456 = vmatpush1.msra.mxu0 0.0
    %457 = vmatprep.subr.mxu0 0.0
    %458 = vmatpush1.msra.mxu0 0.0
    %459 = vmatprep.subr.mxu0 0.0
    %460 = vmatpush1.msra.mxu0 0.0
    %461 = vmatprep.subr.mxu0 0.0
    %462 = vmatpush1.msra.mxu0 0.0
    %463 = vmatprep.subr.mxu0 0.0
    %464 = vmatpush1.msra.mxu0 0.0
    %465 = vmatprep.subr.mxu0 0.0
    %466 = vmatpush1.msra.mxu0 0.0
    %467 = vmatprep.subr.mxu0 0.0
    %468 = vmatpush1.msra.mxu0 0.0
    %469 = vmatprep.subr.mxu0 0.0
    %470 = vmatpush1.msra.mxu0 0.0
    %471 = vmatprep.subr.mxu0 0.0
    %472 = vmatpush1.msra.mxu0 0.0
    %473 = vmatprep.subr.mxu0 0.0
    %474 = vmatpush1.msra.mxu0 0.0
    %475 = vmatprep.subr.mxu0 0.0
    %476 = vmatpush1.msra.mxu0 0.0
    %477 = vmatprep.subr.mxu0 0.0
    %478 = vmatpush1.msra.mxu0 0.0
    %479 = vmatprep.subr.mxu0 0.0
    %480 = vmatpush1.msra.mxu0 0.0
    %481 = vmatprep.subr.mxu0 0.0
    %482 = vmatpush1.msra.mxu0 0.0
    %483 = vmatprep.mubr.f32.mxu0 0.0
    %484 = vmatmul.mubr.f32.gmra.mrb[0].mxu0 %v418
    %v485 = vpop.f32.mrb[0].mxu0
    %v486 = vadd.f32 0.0, %v485
    %v487 = vpop.f32.mrb[0].mxu0
    %488 = vdwg.mxu0
    %v489 = vadd.f32 %v164, %v486
    %v490 = vmax.f32 %v489, 0.0
    %491 = vmatprep.subr.mxu0 0.0
    %492 = vmatpush1.msra.mxu0 %v187
    %493 = vmatprep.subr.mxu0 0.0
    %494 = vmatpush1.msra.mxu0 %v188
    %495 = vmatprep.subr.mxu0 0.0
    %496 = vmatpush1.msra.mxu0 %v189
    %497 = vmatprep.subr.mxu0 0.0
    %498 = vmatpush1.msra.mxu0 %v190
    %499 = vmatprep.subr.mxu0 0.0
    %500 = vmatpush1.msra.mxu0 %v191
    %501 = vmatprep.subr.mxu0 0.0
    %502 = vmatpush1.msra.mxu0 %v192
    %503 = vmatprep.subr.mxu0 0.0
    %504 = vmatpush1.msra.mxu0 %v193
    %505 = vmatprep.subr.mxu0 0.0
    %506 = vmatpush1.msra.mxu0 %v194
    %507 = vmatprep.subr.mxu0 0.0
    %508 = vmatpush1.msra.mxu0 %v195
    %509 = vmatprep.subr.mxu0 0.0
    %510 = vmatpush1.msra.mxu0 %v196
    %511 = vmatprep.subr.mxu0 0.0
    %512 = vmatpush1.msra.mxu0 %v197
    %513 = vmatprep.subr.mxu0 0.0
    %514 = vmatpush1.msra.mxu0 %v198
    %515 = vmatprep.subr.mxu0 0.0
    %516 = vmatpush1.msra.mxu0 %v199
    %517 = vmatprep.subr.mxu0 0.0
    %518 = vmatpush1.msra.mxu0 %v200
    %519 = vmatprep.subr.mxu0 0.0
    %520 = vmatpush1.msra.mxu0 %v201
    %521 = vmatprep.subr.mxu0 0.0
    %522 = vmatpush1.msra.mxu0 %v202
    %523 = vmatprep.subr.mxu0 0.0
    %524 = vmatpush1.msra.mxu0 0.0
    %525 = vmatprep.subr.mxu0 0.0
    %526 = vmatpush1.msra.mxu0 0.0
    %527 = vmatprep.subr.mxu0 0.0
    %528 = vmatpush1.msra.mxu0 0.0
    %529 = vmatprep.subr.mxu0 0.0
    %530 = vmatpush1.msra.mxu0 0.0
    %531 = vmatprep.subr.mxu0 0.0
    %532 = vmatpush1.msra.mxu0 0.0
    %533 = vmatprep.subr.mxu0 0.0
    %534 = vmatpush1.msra.mxu0 0.0
    %535 = vmatprep.subr.mxu0 0.0
    %536 = vmatpush1.msra.mxu0 0.0
    %537 = vmatprep.subr.mxu0 0.0
    %538 = vmatpush1.msra.mxu0 0.0
    %539 = vmatprep.subr.mxu0 0.0
    %540 = vmatpush1.msra.mxu0 0.0
    %541 = vmatprep.subr.mxu0 0.0
    %542 = vmatpush1.msra.mxu0 0.0
    %543 = vmatprep.subr.mxu0 0.0
    %544 = vmatpush1.msra.mxu0 0.0
    %545 = vmatprep.subr.mxu0 0.0
    %546 = vmatpush1.msra.mxu0 0.0
    %547 = vmatprep.subr.mxu0 0.0
    %548 = vmatpush1.msra.mxu0 0.0
    %549 = vmatprep.subr.mxu0 0.0
    %550 = vmatpush1.msra.mxu0 0.0
    %551 = vmatprep.subr.mxu0 0.0
    %552 = vmatpush1.msra.mxu0 0.0
    %553 = vmatprep.subr.mxu0 0.0
    %554 = vmatpush1.msra.mxu0 0.0
    %555 = vmatprep.mubr.f32.mxu0 0.0
    %556 = vmatmul.mubr.f32.gmra.mrb[0].mxu0 %v490
    %v557 = vpop.f32.mrb[0].mxu0
    %v558 = vadd.f32 0.0, %v557
    %v559 = vpop.f32.mrb[0].mxu0
    %560 = vdwg.mxu0
    %v561 = vadd.f32 %v169, %v558
    %v562 = vmax.f32 %v561, 0.0
    %563 = vmatprep.subr.mxu0 0.0
    %564 = vmatpush1.msra.mxu0 %v187
    %565 = vmatprep.subr.mxu0 0.0
    %566 = vmatpush1.msra.mxu0 %v188
    %567 = vmatprep.subr.mxu0 0.0
    %568 = vmatpush1.msra.mxu0 %v189
    %569 = vmatprep.subr.mxu0 0.0
    %570 = vmatpush1.msra.mxu0 %v190
    %571 = vmatprep.subr.mxu0 0.0
    %572 = vmatpush1.msra.mxu0 %v191
    %573 = vmatprep.subr.mxu0 0.0
    %574 = vmatpush1.msra.mxu0 %v192
    %575 = vmatprep.subr.mxu0 0.0
    %576 = vmatpush1.msra.mxu0 %v193
    %577 = vmatprep.subr.mxu0 0.0
    %578 = vmatpush1.msra.mxu0 %v194
    %579 = vmatprep.subr.mxu0 0.0
    %580 = vmatpush1.msra.mxu0 %v195
    %581 = vmatprep.subr.mxu0 0.0
    %582 = vmatpush1.msra.mxu0 %v196
    %583 = vmatprep.subr.mxu0 0.0
    %584 = vmatpush1.msra.mxu0 %v197
    %585 = vmatprep.subr.mxu0 0.0
    %586 = vmatpush1.msra.mxu0 %v198
    %587 = vmatprep.subr.mxu0 0.0
    %588 = vmatpush1.msra.mxu0 %v199
    %589 = vmatprep.subr.mxu0 0.0
    %590 = vmatpush1.msra.mxu0 %v200
    %591 = vmatprep.subr.mxu0 0.0
    %592 = vmatpush1.msra.mxu0 %v201
    %593 = vmatprep.subr.mxu0 0.0
    %594 = vmatpush1.msra.mxu0 %v202
    %595 = vmatprep.subr.mxu0 0.0
    %596 = vmatpush1.msra.mxu0 0.0
    %597 = vmatprep.subr.mxu0 0.0
    %598 = vmatpush1.msra.mxu0 0.0
    %599 = vmatprep.subr.mxu0 0.0
    %600 = vmatpush1.msra.mxu0 0.0
    %601 = vmatprep.subr.mxu0 0.0
    %602 = vmatpush1.msra.mxu0 0.0
    %603 = vmatprep.subr.mxu0 0.0
    %604 = vmatpush1.msra.mxu0 0.0
    %605 = vmatprep.subr.mxu0 0.0
    %606 = vmatpush1.msra.mxu0 0.0
    %607 = vmatprep.subr.mxu0 0.0
    %608 = vmatpush1.msra.mxu0 0.0
    %609 = vmatprep.subr.mxu0 0.0
    %610 = vmatpush1.msra.mxu0 0.0
    %611 = vmatprep.subr.mxu0 0.0
    %612 = vmatpush1.msra.mxu0 0.0
    %613 = vmatprep.subr.mxu0 0.0
    %614 = vmatpush1.msra.mxu0 0.0
    %615 = vmatprep.subr.mxu0 0.0
    %616 = vmatpush1.msra.mxu0 0.0
    %617 = vmatprep.subr.mxu0 0.0
    %618 = vmatpush1.msra.mxu0 0.0
    %619 = vmatprep.subr.mxu0 0.0
    %620 = vmatpush1.msra.mxu0 0.0
    %621 = vmatprep.subr.mxu0 0.0
    %622 = vmatpush1.msra.mxu0 0.0
    %623 = vmatprep.subr.mxu0 0.0
    %624 = vmatpush1.msra.mxu0 0.0
    %625 = vmatprep.subr.mxu0 0.0
    %626 = vmatpush1.msra.mxu0 0.0
    %627 = vmatprep.mubr.f32.mxu0 0.0
    %628 = vmatmul.mubr.f32.gmra.mrb[0].mxu0 %v562
    %v629 = vpop.f32.mrb[0].mxu0
    %v630 = vadd.f32 0.0, %v629
    %v631 = vpop.f32.mrb[0].mxu0
    %632 = vdwg.mxu0
    %v633 = vadd.f32 %v174, %v630
    %v634 = vmax.f32 %v633, 0.0
    %635 = vmatprep.subr.mxu0 0.0
    %636 = vmatpush1.msra.mxu0 %v187
    %637 = vmatprep.subr.mxu0 0.0
    %638 = vmatpush1.msra.mxu0 %v188
    %639 = vmatprep.subr.mxu0 0.0
    %640 = vmatpush1.msra.mxu0 %v189
    %641 = vmatprep.subr.mxu0 0.0
    %642 = vmatpush1.msra.mxu0 %v190
    %643 = vmatprep.subr.mxu0 0.0
    %644 = vmatpush1.msra.mxu0 %v191
    %645 = vmatprep.subr.mxu0 0.0
    %646 = vmatpush1.msra.mxu0 %v192
    %647 = vmatprep.subr.mxu0 0.0
    %648 = vmatpush1.msra.mxu0 %v193
    %649 = vmatprep.subr.mxu0 0.0
    %650 = vmatpush1.msra.mxu0 %v194
    %651 = vmatprep.subr.mxu0 0.0
    %652 = vmatpush1.msra.mxu0 %v195
    %653 = vmatprep.subr.mxu0 0.0
    %654 = vmatpush1.msra.mxu0 %v196
    %655 = vmatprep.subr.mxu0 0.0
    %656 = vmatpush1.msra.mxu0 %v197
    %657 = vmatprep.subr.mxu0 0.0
    %658 = vmatpush1.msra.mxu0 %v198
    %659 = vmatprep.subr.mxu0 0.0
    %660 = vmatpush1.msra.mxu0 %v199
    %661 = vmatprep.subr.mxu0 0.0
    %662 = vmatpush1.msra.mxu0 %v200
    %663 = vmatprep.subr.mxu0 0.0
    %664 = vmatpush1.msra.mxu0 %v201
    %665 = vmatprep.subr.mxu0 0.0
    %666 = vmatpush1.msra.mxu0 %v202
    %667 = vmatprep.subr.mxu0 0.0
    %668 = vmatpush1.msra.mxu0 0.0
    %669 = vmatprep.subr.mxu0 0.0
    %670 = vmatpush1.msra.mxu0 0.0
    %671 = vmatprep.subr.mxu0 0.0
    %672 = vmatpush1.msra.mxu0 0.0
    %673 = vmatprep.subr.mxu0 0.0
    %674 = vmatpush1.msra.mxu0 0.0
    %675 = vmatprep.subr.mxu0 0.0
    %676 = vmatpush1.msra.mxu0 0.0
    %677 = vmatprep.subr.mxu0 0.0
    %678 = vmatpush1.msra.mxu0 0.0
    %679 = vmatprep.subr.mxu0 0.0
    %680 = vmatpush1.msra.mxu0 0.0
    %681 = vmatprep.subr.mxu0 0.0
    %682 = vmatpush1.msra.mxu0 0.0
    %683 = vmatprep.subr.mxu0 0.0
    %684 = vmatpush1.msra.mxu0 0.0
    %685 = vmatprep.subr.mxu0 0.0
    %686 = vmatpush1.msra.mxu0 0.0
    %687 = vmatprep.subr.mxu0 0.0
    %688 = vmatpush1.msra.mxu0 0.0
    %689 = vmatprep.subr.mxu0 0.0
    %690 = vmatpush1.msra.mxu0 0.0
    %691 = vmatprep.subr.mxu0 0.0
    %692 = vmatpush1.msra.mxu0 0.0
    %693 = vmatprep.subr.mxu0 0.0
    %694 = vmatpush1.msra.mxu0 0.0
    %695 = vmatprep.subr.mxu0 0.0
    %696 = vmatpush1.msra.mxu0 0.0
    %697 = vmatprep.subr.mxu0 0.0
    %698 = vmatpush1.msra.mxu0 0.0
    %699 = vmatprep.mubr.f32.mxu0 0.0
    %700 = vmatmul.mubr.f32.gmra.mrb[0].mxu0 %v634
    %v701 = vpop.f32.mrb[0].mxu0
    %v702 = vadd.f32 0.0, %v701
    %v703 = vpop.f32.mrb[0].mxu0
    %704 = vdwg.mxu0
    %v705 = vadd.f32 %v179, %v702
    %v706 = vmax.f32 %v705, 0.0
    %707 = vmatprep.subr.mxu0 0.0
    %708 = vmatpush1.msra.mxu0 %v187
    %709 = vmatprep.subr.mxu0 0.0
    %710 = vmatpush1.msra.mxu0 %v188
    %711 = vmatprep.subr.mxu0 0.0
    %712 = vmatpush1.msra.mxu0 %v189
    %713 = vmatprep.subr.mxu0 0.0
    %714 = vmatpush1.msra.mxu0 %v190
    %715 = vmatprep.subr.mxu0 0.0
    %716 = vmatpush1.msra.mxu0 %v191
    %717 = vmatprep.subr.mxu0 0.0
    %718 = vmatpush1.msra.mxu0 %v192
    %719 = vmatprep.subr.mxu0 0.0
    %720 = vmatpush1.msra.mxu0 %v193
    %721 = vmatprep.subr.mxu0 0.0
    %722 = vmatpush1.msra.mxu0 %v194
    %723 = vmatprep.subr.mxu0 0.0
    %724 = vmatpush1.msra.mxu0 %v195
    %725 = vmatprep.subr.mxu0 0.0
    %726 = vmatpush1.msra.mxu0 %v196
    %727 = vmatprep.subr.mxu0 0.0
    %728 = vmatpush1.msra.mxu0 %v197
    %729 = vmatprep.subr.mxu0 0.0
    %730 = vmatpush1.msra.mxu0 %v198
    %731 = vmatprep.subr.mxu0 0.0
    %732 = vmatpush1.msra.mxu0 %v199
    %733 = vmatprep.subr.mxu0 0.0
    %734 = vmatpush1.msra.mxu0 %v200
    %735 = vmatprep.subr.mxu0 0.0
    %736 = vmatpush1.msra.mxu0 %v201
    %737 = vmatprep.subr.mxu0 0.0
    %738 = vmatpush1.msra.mxu0 %v202
    %739 = vmatprep.subr.mxu0 0.0
    %740 = vmatpush1.msra.mxu0 0.0
    %741 = vmatprep.subr.mxu0 0.0
    %742 = vmatpush1.msra.mxu0 0.0
    %743 = vmatprep.subr.mxu0 0.0
    %744 = vmatpush1.msra.mxu0 0.0
    %745 = vmatprep.subr.mxu0 0.0
    %746 = vmatpush1.msra.mxu0 0.0
    %747 = vmatprep.subr.mxu0 0.0
    %748 = vmatpush1.msra.mxu0 0.0
    %749 = vmatprep.subr.mxu0 0.0
    %750 = vmatpush1.msra.mxu0 0.0
    %751 = vmatprep.subr.mxu0 0.0
    %752 = vmatpush1.msra.mxu0 0.0
    %753 = vmatprep.subr.mxu0 0.0
    %754 = vmatpush1.msra.mxu0 0.0
    %755 = vmatprep.subr.mxu0 0.0
    %756 = vmatpush1.msra.mxu0 0.0
    %757 = vmatprep.subr.mxu0 0.0
    %758 = vmatpush1.msra.mxu0 0.0
    %759 = vmatprep.subr.mxu0 0.0
    %760 = vmatpush1.msra.mxu0 0.0
    %761 = vmatprep.subr.mxu0 0.0
    %762 = vmatpush1.msra.mxu0 0.0
    %763 = vmatprep.subr.mxu0 0.0
    %764 = vmatpush1.msra.mxu0 0.0
    %765 = vmatprep.subr.mxu0 0.0
    %766 = vmatpush1.msra.mxu0 0.0
    %767 = vmatprep.subr.mxu0 0.0
    %768 = vmatpush1.msra.mxu0 0.0
    %769 = vmatprep.subr.mxu0 0.0
    %770 = vmatpush1.msra.mxu0 0.0
    %771 = vmatprep.mubr.f32.mxu0 0.0
    %772 = vmatmul.mubr.f32.gmra.mrb[0].mxu0 %v706
    %v773 = vpop.f32.mrb[0].mxu0
    %v774 = vadd.f32 0.0, %v773
    %v775 = vpop.f32.mrb[0].mxu0
    %776 = vdwg.mxu0
    %v777 = vadd.f32 %v184, %v774
    %v778 = vmax.f32 %v777, 0.0
    %v779 = vld [vmem:[#allocation4] sm:$0xff]
    %v780 = vld [vmem:[#allocation4 + $0x8] sm:$0xff]
    %v781 = vld [vmem:[#allocation4 + $0x10] sm:$0xff]
    %v782 = vld [vmem:[#allocation4 + $0x18] sm:$0xff]
    %v783 = vld [vmem:[#allocation4 + $0x20] sm:$0xff]
    %v784 = vld [vmem:[#allocation4 + $0x28] sm:$0xff]
    %v785 = vld [vmem:[#allocation4 + $0x30] sm:$0xff]
    %v786 = vld [vmem:[#allocation4 + $0x38] sm:$0xff]
    %v787 = vld [vmem:[#allocation4 + $0x40] sm:$0xff]
    %v788 = vld [vmem:[#allocation4 + $0x48] sm:$0xff]
    %v789 = vld [vmem:[#allocation4 + $0x50] sm:$0xff]
    %v790 = vld [vmem:[#allocation4 + $0x58] sm:$0xff]
    %v791 = vld [vmem:[#allocation4 + $0x60] sm:$0xff]
    %v792 = vld [vmem:[#allocation4 + $0x68] sm:$0xff]
    %v793 = vld [vmem:[#allocation4 + $0x70] sm:$0xff]
    %v794 = vld [vmem:[#allocation4 + $0x78] sm:$0xff]
    %v795 = vld [vmem:[%s5] sm:$0x1]
    %v797 = vlaneseq
    %v798 = vshrl.u32 %v797, 7
    %v799 = vsub.s32 0, %v798
    %v800 = vrot.slane %v795, %v799
    %802 = vmatprep.subr.mxu0 0.0
    %803 = vmatpush1.msra.mxu0 %v779
    %804 = vmatprep.subr.mxu0 0.0
    %805 = vmatpush1.msra.mxu0 %v780
    %806 = vmatprep.subr.mxu0 0.0
    %807 = vmatpush1.msra.mxu0 %v781
    %808 = vmatprep.subr.mxu0 0.0
    %809 = vmatpush1.msra.mxu0 %v782
    %810 = vmatprep.subr.mxu0 0.0
    %811 = vmatpush1.msra.mxu0 %v783
    %812 = vmatprep.subr.mxu0 0.0
    %813 = vmatpush1.msra.mxu0 %v784
    %814 = vmatprep.subr.mxu0 0.0
    %815 = vmatpush1.msra.mxu0 %v785
    %816 = vmatprep.subr.mxu0 0.0
    %817 = vmatpush1.msra.mxu0 %v786
    %818 = vmatprep.subr.mxu0 0.0
    %819 = vmatpush1.msra.mxu0 %v787
    %820 = vmatprep.subr.mxu0 0.0
    %821 = vmatpush1.msra.mxu0 %v788
    %822 = vmatprep.subr.mxu0 0.0
    %823 = vmatpush1.msra.mxu0 %v789
    %824 = vmatprep.subr.mxu0 0.0
    %825 = vmatpush1.msra.mxu0 %v790
    %826 = vmatprep.subr.mxu0 0.0
    %827 = vmatpush1.msra.mxu0 %v791
    %828 = vmatprep.subr.mxu0 0.0
    %829 = vmatpush1.msra.mxu0 %v792
    %830 = vmatprep.subr.mxu0 0.0
    %831 = vmatpush1.msra.mxu0 %v793
    %832 = vmatprep.subr.mxu0 0.0
    %833 = vmatpush1.msra.mxu0 %v794
    %834 = vmatprep.subr.mxu0 0.0
    %835 = vmatpush1.msra.mxu0 0.0
    %836 = vmatprep.subr.mxu0 0.0
    %837 = vmatpush1.msra.mxu0 0.0
    %838 = vmatprep.subr.mxu0 0.0
    %839 = vmatpush1.msra.mxu0 0.0
    %840 = vmatprep.subr.mxu0 0.0
    %841 = vmatpush1.msra.mxu0 0.0
    %842 = vmatprep.subr.mxu0 0.0
    %843 = vmatpush1.msra.mxu0 0.0
    %844 = vmatprep.subr.mxu0 0.0
    %845 = vmatpush1.msra.mxu0 0.0
    %846 = vmatprep.subr.mxu0 0.0
    %847 = vmatpush1.msra.mxu0 0.0
    %848 = vmatprep.subr.mxu0 0.0
    %849 = vmatpush1.msra.mxu0 0.0
    %850 = vmatprep.subr.mxu0 0.0
    %851 = vmatpush1.msra.mxu0 0.0
    %852 = vmatprep.subr.mxu0 0.0
    %853 = vmatpush1.msra.mxu0 0.0
    %854 = vmatprep.subr.mxu0 0.0
    %855 = vmatpush1.msra.mxu0 0.0
    %856 = vmatprep.subr.mxu0 0.0
    %857 = vmatpush1.msra.mxu0 0.0
    %858 = vmatprep.subr.mxu0 0.0
    %859 = vmatpush1.msra.mxu0 0.0
    %860 = vmatprep.subr.mxu0 0.0
    %861 = vmatpush1.msra.mxu0 0.0
    %862 = vmatprep.subr.mxu0 0.0
    %863 = vmatpush1.msra.mxu0 0.0
    %864 = vmatprep.subr.mxu0 0.0
    %865 = vmatpush1.msra.mxu0 0.0
    %866 = vmatprep.mubr.f32.mxu0 0.0
    %867 = vmatmul.mubr.f32.gmra.mrb[0].mxu0 %v778
    %v868 = vpop.f32.mrb[0].mxu0
    %v869 = vadd.f32 %v800, %v868
    %v870 = vpop.f32.mrb[0].mxu0
    %871 = vdwg.mxu0
    %872 = vst [vmem:[%s6] sm:$0xff] %v869
    // Predicated region
    $region34: #{rnn_model_forward.1} parent=1 // pred_check
      _
    $region35: #{rnn_model_forward.1} parent=1 // pred_check_branch
      %874 = sbr.rel (0) target = $region37
    $region36: #{rnn_model_forward.1} parent=1 // pred_region
      _
    $region37: #{rnn_model_forward.1} parent=1 // pred_fallthru
      _
    // Predicated region
    $region38: #{rnn_model_forward.1} parent=1 // pred_check
      _
    $region39: #{rnn_model_forward.1} parent=1 // pred_check_branch
      %876 = sbr.rel (0) target = $region41
    $region40: #{rnn_model_forward.1} parent=1 // pred_region
      _
    $region41: #{rnn_model_forward.1} parent=1 // pred_fallthru
      _
    %877 = vsyncpa [#allocation3], 1
    %878 = vsyncpa [#allocation5], 1

</llo_original>
